<compile_context>
chip_gen: v5e
topology: v5e:2x2
jax: 0.10.0
libtpu: 0.0.40
codegen_flags: <defaults>
</compile_context>

<pallas_src>
import functools

import jax
import jax.numpy as jnp
from jax.experimental import pallas as pl
from jax.experimental.pallas import tpu as pltpu


def _round_up(x, m):
    return ((x + m - 1) // m) * m


def _num_tensorcores():
    """2 for dual-TensorCore devices (v4/v5p megacore, 7x), else 1."""
    try:
        kind = jax.devices()[0].device_kind.lower()
    except Exception:
        return 1
    if any(t in kind for t in ("v4", "v5p", "7x", "v7")):
        return 2
    return 1


def _nll_loss_kernel(pred_ref, tgt_ref, w_ref, cls_ref, e_ref, out_ref,
                     num_acc, den_acc):
    """Accumulates weighted-NLL numerator/denominator over row tiles.

    pred_ref : (TN, W)  log-probs (f32 or bf16); W = r*C lane-packed (or W = C)
    tgt_ref  : (TN, r)  int32 targets, one per packed row slot (-1 => ignored)
    w_ref    : (1, W)   per-class weights tiled r times (resident)
    cls_ref  : (1, W)   f32 lane -> class-id constant (resident)
    e_ref    : (r, W)   f32 0/1 slot-expansion matrix (resident; unused if r==1)
    out_ref  : (8, 128) per-core output block; lane 0 = numerator, lane 1 = denom
    num_acc, den_acc : (1, W) f32 VMEM accumulators (persist across grid steps)
    """
    step = pl.program_id(1)

    @pl.when(step == 0)
    def _init():
        num_acc[...] = jnp.zeros_like(num_acc)
        den_acc[...] = jnp.zeros_like(den_acc)

    pred = pred_ref[...].astype(jnp.float32)          # (TN, W), upcast after load
    w = w_ref[...]                                    # (1, W) f32
    cls = cls_ref[...]                                # (1, W) f32

    tn, w_lanes = pred.shape
    r = tgt_ref.shape[1]
    tgt_f = tgt_ref[...].astype(jnp.float32)          # (TN, r)

    if r == 1:
        sel = tgt_f                                   # (TN, 1): lane-broadcasts vs cls
    else:
        # Slot expansion on the (otherwise idle) MXU:
        # sel[row, lane] = target of the original row that lane belongs to.
        sel = jnp.dot(tgt_f, e_ref[...], preferred_element_type=jnp.float32)

    # Weighted one-hot.  Out-of-range targets (row padding -1, ignore_index -100,
    # garbage rows of a partial last block whose padded targets are -1) match no
    # lane, so they contribute 0 to numerator and denominator; jnp.where also
    # discards any NaN/Inf garbage in the unselected branch.
    cond = cls == sel                                 # (TN, W)
    wsel = jnp.where(cond, w, 0.0)                    # weight[target] at target lane
    contrib = jnp.where(cond, pred * w, 0.0)          # weight[target] * logp[target]

    num_acc[...] += jnp.sum(contrib, axis=0, keepdims=True)   # (1, W) vector partial
    den_acc[...] += jnp.sum(wsel, axis=0, keepdims=True)

    @pl.when(step == pl.num_programs(1) - 1)
    def _finalize():
        num11 = jnp.sum(num_acc[...], axis=1, keepdims=True)  # (1, 1)
        den11 = jnp.sum(den_acc[...], axis=1, keepdims=True)  # (1, 1)
        lane = jax.lax.broadcasted_iota(jnp.int32, out_ref.shape, 1)
        out_ref[...] = jnp.where(lane == 0, num11,
                                 jnp.where(lane == 1, den11, 0.0))


@functools.partial(jax.jit, static_argnames=("block_rows", "core_split"))
def _nll_loss_impl(pred, target, weight, *, block_rows, core_split):
    n, c = pred.shape
    weight = weight.astype(jnp.float32)
    target = target.astype(jnp.int32)

    # ---- class (lane) packing: only when it is a free view (no pred copy) ----
    if c <= 128 and 128 % c == 0 and n % (128 // c) == 0:
        r = 128 // c
        pred_packed = pred.reshape(n // r, r * c)     # pure (bitcast) reshape
    else:
        r = 1                                         # zero-copy; lane-sparse if c<128
        pred_packed = pred
    w_lanes = r * c
    n_packed = pred_packed.shape[0]

    # ---- row tiling: no pred padding; ragged tail masked in-kernel -----------
    tn = min(_round_up(block_rows, 8), _round_up(n_packed, 8))
    blocks_data = -(-n_packed // tn)                  # blocks holding real rows
    blocks = _round_up(blocks_data, core_split)
    bpc = blocks // core_split
    last_blk = blocks_data - 1

    # target is tiny: pad it over the whole grid extent with -1 so the ragged
    # tail and any core-split overflow blocks select no class at all.
    tgt_full = jnp.full((blocks * tn * r,), -1, dtype=jnp.int32)
    tgt_full = tgt_full.at[:n].set(target)
    tgt_packed = tgt_full.reshape(blocks * tn, r)

    # Resident constants (loaded once, re-used across the grid).
    w_tiled = jnp.tile(weight, r).reshape(1, w_lanes)
    lanes = jnp.arange(w_lanes, dtype=jnp.int32)
    cls_id = (lanes % c).astype(jnp.float32).reshape(1, w_lanes)
    expand = ((lanes // c)[None, :] ==
              jnp.arange(r, dtype=jnp.int32)[:, None]).astype(jnp.float32)  # (r, W)

    pred_map = lambda s, i: (jnp.minimum(s * bpc + i, last_blk), 0)  # clamp overflow
    tgt_map = lambda s, i: (s * bpc + i, 0)
    res_map = lambda s, i: (0, 0)

    out = pl.pallas_call(
        _nll_loss_kernel,
        out_shape=jax.ShapeDtypeStruct((core_split * 8, 128), jnp.float32),
        grid_spec=pltpu.PrefetchScalarGridSpec(
            num_scalar_prefetch=0,
            grid=(core_split, bpc),
            in_specs=[
                pl.BlockSpec((tn, w_lanes), pred_map),
                pl.BlockSpec((tn, r), tgt_map),
                pl.BlockSpec((1, w_lanes), res_map),   # weights (resident)
                pl.BlockSpec((1, w_lanes), res_map),   # lane -> class id (resident)
                pl.BlockSpec((r, w_lanes), res_map),   # slot-expansion E (resident)
            ],
            out_specs=pl.BlockSpec((8, 128), lambda s, i: (s, 0)),
            scratch_shapes=[
                pltpu.VMEM((1, w_lanes), jnp.float32),  # numerator partial
                pltpu.VMEM((1, w_lanes), jnp.float32),  # denominator partial
            ],
        ),
        compiler_params=pltpu.CompilerParams(
            dimension_semantics=("parallel", "arbitrary"),
        ),
    )(pred_packed, tgt_packed, w_tiled, cls_id, expand)

    partials = out.reshape(core_split, 8, 128)
    num = jnp.sum(partials[:, 0, 0])
    den = jnp.sum(partials[:, 0, 1])
    # NOTE: matches PyTorch — zero total selected weight yields NaN (0/0).
    return -num / den


def nll_loss_pallas(pred, target, weight, *, block_rows=4096, core_split=None):
    """Weighted-mean NLL loss, equivalent to F.nll_loss(pred, target, weight=weight).

    pred: (N, C) float log-probabilities (f32 or bf16), target: (N,) int, weight: (C,).
    """
    if core_split is None:
        core_split = _num_tensorcores()
    return _nll_loss_impl(pred, target, weight,
                          block_rows=block_rows, core_split=core_split)


def get_loss(pred, target, trans_feat, weight):
    """Mirrors the PyTorch module signature; trans_feat is unused."""
    del trans_feat
    return nll_loss_pallas(pred, target, weight)


def _reference_nll_loss(pred, target, weight):
    pred = pred.astype(jnp.float32)
    picked = jnp.take_along_axis(pred, target[:, None], axis=1)[:, 0]
    w_sel = weight[target].astype(jnp.float32)
    return -jnp.sum(w_sel * picked) / jnp.sum(w_sel)


if __name__ == "__main__":
    key = jax.random.PRNGKey(0)
    k_logits, k_target, k_weight, k_trans = jax.random.split(key, 4)

    batch, npoint, num_classes = 2, 128, 16      # pred rows = B * N = 256
    n_rows = batch * npoint

    logits = jax.random.normal(k_logits, (n_rows, num_classes), dtype=jnp.float32)
    pred = jax.nn.log_softmax(logits, axis=-1)   # NLL expects log-probabilities
    target = jax.random.randint(k_target, (n_rows,), 0, num_classes, dtype=jnp.int32)
    weight = jax.random.uniform(k_weight, (num_classes,), dtype=jnp.float32,
                                minval=0.5, maxval=1.5)
    trans_feat = jax.random.normal(k_trans, (batch, 64, 64), dtype=jnp.float32)  # unused

    loss = jax.block_until_ready(get_loss(pred, target, trans_feat, weight))
    ref = _reference_nll_loss(pred, target, weight)
    assert jnp.allclose(loss, ref, rtol=1e-5, atol=1e-5), (loss, ref)

    # bf16 log-probs are accepted directly (upcast happens inside the kernel).
    loss_bf16 = jax.block_until_ready(
        get_loss(pred.astype(jnp.bfloat16), target, trans_feat, weight))
    ref_bf16 = _reference_nll_loss(pred.astype(jnp.bfloat16), target, weight)
    assert jnp.allclose(loss_bf16, ref_bf16, rtol=1e-4, atol=1e-4), (loss_bf16, ref_bf16)

    # Ragged / non-power-of-two shape (real sem-seg has 13 classes): exercises the
    # zero-copy unpacked path and in-kernel masking of a partial last block.
    k2a, k2b, k2c = jax.random.split(jax.random.PRNGKey(1), 3)
    n2, c2 = 250, 13
    pred2 = jax.nn.log_softmax(jax.random.normal(k2a, (n2, c2), jnp.float32), -1)
    target2 = jax.random.randint(k2b, (n2,), 0, c2, dtype=jnp.int32)
    weight2 = jax.random.uniform(k2c, (c2,), jnp.float32, minval=0.5, maxval=1.5)
    loss2 = jax.block_until_ready(nll_loss_pallas(pred2, target2, weight2))
    ref2 = _reference_nll_loss(pred2, target2, weight2)
    assert jnp.allclose(loss2, ref2, rtol=1e-5, atol=1e-5), (loss2, ref2)

    print("KERNEL_OK")
</pallas_src>

<mosaic_0001>
module attributes {stable_mosaic.version = 11 : i64} {
  func.func @_nll_loss_kernel(%arg0: i32, %arg1: i32, %arg2: memref<32x128xf32, #tpu.memory_space<vmem>>, %arg3: memref<32x8xi32, #tpu.memory_space<vmem>>, %arg4: memref<1x128xf32, #tpu.memory_space<vmem>>, %arg5: memref<1x128xf32, #tpu.memory_space<vmem>>, %arg6: memref<8x128xf32, #tpu.memory_space<vmem>>, %arg7: memref<8x128xf32, #tpu.memory_space<vmem>>, %arg8: memref<1x128xf32, #tpu.memory_space<vmem>>, %arg9: memref<1x128xf32, #tpu.memory_space<vmem>>) attributes {dimension_semantics = [#tpu.dimension_semantics<parallel>, #tpu.dimension_semantics<arbitrary>], iteration_bounds = array<i64: 1, 1>, scalar_prefetch = 0 : i64, scratch_operands = 2 : i64, tpu.core_type = #tpu.core_type<tc>, window_params = [{transform_indices = @transform_0, window_bounds = array<i64: 32, 128>}, {transform_indices = @transform_1, window_bounds = array<i64: 32, 8>}, {pipeline_mode = #tpu.pipeline_mode<synchronous>, transform_indices = @transform_2, window_bounds = array<i64: 1, 128>}, {pipeline_mode = #tpu.pipeline_mode<synchronous>, transform_indices = @transform_3, window_bounds = array<i64: 1, 128>}, {pipeline_mode = #tpu.pipeline_mode<synchronous>, transform_indices = @transform_4, window_bounds = array<i64: 8, 128>}, {transform_indices = @transform_5, window_bounds = array<i64: 8, 128>}]} {
    %c0_i32 = arith.constant 0 : i32
    %0 = arith.cmpi eq, %arg1, %c0_i32 : i32
    %1 = arith.extui %0 : i1 to i32
    %c0_i32_0 = arith.constant 0 : i32
    %2 = arith.cmpi ne, %1, %c0_i32_0 : i32
    scf.if %2 {
      %cst_24 = arith.constant 0.000000e+00 : f32
      %33 = vector.broadcast %cst_24 : f32 to vector<1x128xf32>
      %c0_25 = arith.constant 0 : index
      %c0_26 = arith.constant 0 : index
      %34 = vector.load %arg8[%c0_25, %c0_26] : memref<1x128xf32, #tpu.memory_space<vmem>>, vector<1x128xf32>
      tpu.vector_store %arg8[%c0_25, %c0_26], %33 {strides = array<i32>} : memref<1x128xf32, #tpu.memory_space<vmem>>, vector<1x128xf32>,
      %cst_27 = arith.constant 0.000000e+00 : f32
      %35 = vector.broadcast %cst_27 : f32 to vector<1x128xf32>
      %c0_28 = arith.constant 0 : index
      %c0_29 = arith.constant 0 : index
      %36 = vector.load %arg9[%c0_28, %c0_29] : memref<1x128xf32, #tpu.memory_space<vmem>>, vector<1x128xf32>
      tpu.vector_store %arg9[%c0_28, %c0_29], %35 {strides = array<i32>} : memref<1x128xf32, #tpu.memory_space<vmem>>, vector<1x128xf32>,
    } else {
    }
    %c0 = arith.constant 0 : index
    %c0_1 = arith.constant 0 : index
    %3 = vector.load %arg2[%c0, %c0_1] : memref<32x128xf32, #tpu.memory_space<vmem>>, vector<32x128xf32>
    %c0_2 = arith.constant 0 : index
    %c0_3 = arith.constant 0 : index
    %4 = vector.load %arg4[%c0_2, %c0_3] : memref<1x128xf32, #tpu.memory_space<vmem>>, vector<1x128xf32>
    %c0_4 = arith.constant 0 : index
    %c0_5 = arith.constant 0 : index
    %5 = vector.load %arg5[%c0_4, %c0_5] : memref<1x128xf32, #tpu.memory_space<vmem>>, vector<1x128xf32>
    %c0_6 = arith.constant 0 : index
    %c0_7 = arith.constant 0 : index
    %6 = vector.load %arg3[%c0_6, %c0_7] : memref<32x8xi32, #tpu.memory_space<vmem>>, vector<32x8xi32>
    %7 = arith.sitofp %6 : vector<32x8xi32> to vector<32x8xf32>
    %c0_8 = arith.constant 0 : index
    %c0_9 = arith.constant 0 : index
    %8 = vector.load %arg6[%c0_8, %c0_9] : memref<8x128xf32, #tpu.memory_space<vmem>>, vector<8x128xf32>
    %cst = arith.constant dense<0.000000e+00> : vector<32x128xf32>
    %9 = tpu.matmul %7, %8, %cst {dimension_numbers = #tpu.dot_dimension_numbers<[1], [0], [0], [1], [0, 0, 1, 1], [], []>} : vector<32x8xf32>, vector<8x128xf32>, vector<32x128xf32> -> vector<32x128xf32>
    %10 = vector.broadcast %5 : vector<1x128xf32> to vector<32x128xf32>
    %11 = arith.cmpf oeq, %10, %9 : vector<32x128xf32>
    %cst_10 = arith.constant 0.000000e+00 : f32
    %12 = vector.shape_cast %4 : vector<1x128xf32> to vector<1x128xf32>
    %13 = vector.broadcast %12 : vector<1x128xf32> to vector<32x128xf32>
    %14 = vector.broadcast %cst_10 : f32 to vector<32x128xf32>
    %15 = arith.select %11, %13, %14 : vector<32x128xi1>, vector<32x128xf32>
    %16 = vector.broadcast %4 : vector<1x128xf32> to vector<32x128xf32>
    %17 = arith.mulf %3, %16 : vector<32x128xf32>
    %cst_11 = arith.constant 0.000000e+00 : f32
    %18 = vector.broadcast %cst_11 : f32 to vector<32x128xf32>
    %19 = arith.select %11, %17, %18 : vector<32x128xi1>, vector<32x128xf32>
    %c0_12 = arith.constant 0 : index
    %c0_13 = arith.constant 0 : index
    %20 = vector.load %arg8[%c0_12, %c0_13] : memref<1x128xf32, #tpu.memory_space<vmem>>, vector<1x128xf32>
    %cst_14 = arith.constant dense<0.000000e+00> : vector<128xf32>
    %21 = vector.multi_reduction <add>, %19, %cst_14 [0] : vector<32x128xf32> to vector<128xf32>
    %22 = vector.shape_cast %21 : vector<128xf32> to vector<1x128xf32>
    %23 = arith.addf %20, %22 : vector<1x128xf32>
    %c0_15 = arith.constant 0 : index
    %c0_16 = arith.constant 0 : index
    %24 = vector.load %arg8[%c0_15, %c0_16] : memref<1x128xf32, #tpu.memory_space<vmem>>, vector<1x128xf32>
    tpu.vector_store %arg8[%c0_15, %c0_16], %23 {strides = array<i32>} : memref<1x128xf32, #tpu.memory_space<vmem>>, vector<1x128xf32>,
    %c0_17 = arith.constant 0 : index
    %c0_18 = arith.constant 0 : index
    %25 = vector.load %arg9[%c0_17, %c0_18] : memref<1x128xf32, #tpu.memory_space<vmem>>, vector<1x128xf32>
    %cst_19 = arith.constant dense<0.000000e+00> : vector<128xf32>
    %26 = vector.multi_reduction <add>, %15, %cst_19 [0] : vector<32x128xf32> to vector<128xf32>
    %27 = vector.shape_cast %26 : vector<128xf32> to vector<1x128xf32>
    %28 = arith.addf %25, %27 : vector<1x128xf32>
    %c0_20 = arith.constant 0 : index
    %c0_21 = arith.constant 0 : index
    %29 = vector.load %arg9[%c0_20, %c0_21] : memref<1x128xf32, #tpu.memory_space<vmem>>, vector<1x128xf32>
    tpu.vector_store %arg9[%c0_20, %c0_21], %28 {strides = array<i32>} : memref<1x128xf32, #tpu.memory_space<vmem>>, vector<1x128xf32>,
    %c0_i32_22 = arith.constant 0 : i32
    %30 = arith.cmpi eq, %arg1, %c0_i32_22 : i32
    %31 = arith.extui %30 : i1 to i32
    %c0_i32_23 = arith.constant 0 : i32
    %32 = arith.cmpi ne, %31, %c0_i32_23 : i32
    scf.if %32 {
      %c0_24 = arith.constant 0 : index
      %c0_25 = arith.constant 0 : index
      %33 = vector.load %arg8[%c0_24, %c0_25] : memref<1x128xf32, #tpu.memory_space<vmem>>, vector<1x128xf32>
      %cst_26 = arith.constant dense<0.000000e+00> : vector<1xf32>
      %34 = vector.multi_reduction <add>, %33, %cst_26 [1] : vector<1x128xf32> to vector<1xf32>
      %35 = vector.shape_cast %34 : vector<1xf32> to vector<1x1xf32>
      %c0_27 = arith.constant 0 : index
      %c0_28 = arith.constant 0 : index
      %36 = vector.load %arg9[%c0_27, %c0_28] : memref<1x128xf32, #tpu.memory_space<vmem>>, vector<1x128xf32>
      %cst_29 = arith.constant dense<0.000000e+00> : vector<1xf32>
      %37 = vector.multi_reduction <add>, %36, %cst_29 [1] : vector<1x128xf32> to vector<1xf32>
      %38 = vector.shape_cast %37 : vector<1xf32> to vector<1x1xf32>
      %39 = tpu.iota {dimensions = array<i32: 1>} : vector<8x128xi32>
      %c0_i32_30 = arith.constant 0 : i32
      %40 = vector.broadcast %c0_i32_30 : i32 to vector<8x128xi32>
      %41 = arith.cmpi eq, %39, %40 : vector<8x128xi32>
      %c1_i32 = arith.constant 1 : i32
      %42 = vector.broadcast %c1_i32 : i32 to vector<8x128xi32>
      %43 = arith.cmpi eq, %39, %42 : vector<8x128xi32>
      %cst_31 = arith.constant 0.000000e+00 : f32
      %44 = vector.shape_cast %38 : vector<1x1xf32> to vector<1x1xf32>
      %45 = vector.broadcast %44 : vector<1x1xf32> to vector<8x128xf32>
      %46 = vector.broadcast %cst_31 : f32 to vector<8x128xf32>
      %47 = arith.select %43, %45, %46 : vector<8x128xi1>, vector<8x128xf32>
      %48 = vector.shape_cast %35 : vector<1x1xf32> to vector<1x1xf32>
      %49 = vector.broadcast %48 : vector<1x1xf32> to vector<8x128xf32>
      %50 = arith.select %41, %49, %47 : vector<8x128xi1>, vector<8x128xf32>
      %c0_32 = arith.constant 0 : index
      %c0_33 = arith.constant 0 : index
      %51 = vector.load %arg7[%c0_32, %c0_33] : memref<8x128xf32, #tpu.memory_space<vmem>>, vector<8x128xf32>
      tpu.vector_store %arg7[%c0_32, %c0_33], %50 {strides = array<i32>} : memref<8x128xf32, #tpu.memory_space<vmem>>, vector<8x128xf32>,
    } else {
    }
    return
  }
  func.func @transform_0(%arg0: i32, %arg1: i32) -> (i32, i32) {
    %c1_i32 = arith.constant 1 : i32
    %0 = arith.muli %arg0, %c1_i32 : i32
    %1 = arith.addi %0, %arg1 : i32
    %c0_i32 = arith.constant 0 : i32
    %2 = arith.minsi %1, %c0_i32 : i32
    %c0_i32_0 = arith.constant 0 : i32
    %c0_i32_1 = arith.constant 0 : i32
    return %2, %c0_i32_0 : i32, i32
  }
  func.func @transform_1(%arg0: i32, %arg1: i32) -> (i32, i32) {
    %c1_i32 = arith.constant 1 : i32
    %0 = arith.muli %arg0, %c1_i32 : i32
    %1 = arith.addi %0, %arg1 : i32
    %c0_i32 = arith.constant 0 : i32
    %c0_i32_0 = arith.constant 0 : i32
    return %1, %c0_i32 : i32, i32
  }
  func.func @transform_2(%arg0: i32, %arg1: i32) -> (i32, i32) {
    %c0_i32 = arith.constant 0 : i32
    %c0_i32_0 = arith.constant 0 : i32
    %c0_i32_1 = arith.constant 0 : i32
    return %c0_i32, %c0_i32_0 : i32, i32
  }
  func.func @transform_3(%arg0: i32, %arg1: i32) -> (i32, i32) {
    %c0_i32 = arith.constant 0 : i32
    %c0_i32_0 = arith.constant 0 : i32
    %c0_i32_1 = arith.constant 0 : i32
    return %c0_i32, %c0_i32_0 : i32, i32
  }
  func.func @transform_4(%arg0: i32, %arg1: i32) -> (i32, i32) {
    %c0_i32 = arith.constant 0 : i32
    %c0_i32_0 = arith.constant 0 : i32
    %c0_i32_1 = arith.constant 0 : i32
    return %c0_i32, %c0_i32_0 : i32, i32
  }
  func.func @transform_5(%arg0: i32, %arg1: i32) -> (i32, i32) {
    %c0_i32 = arith.constant 0 : i32
    %c0_i32_0 = arith.constant 0 : i32
    return %arg0, %c0_i32 : i32, i32
  }
}

</mosaic_0001>

<llo_original>
// kernel: tile.8
$region0: #{tile.8}
  #allocation0 [shape = 's32[1]{0}', space=sflag, size = 0x4, scoped, tag = 'scoped memory for tile.8']
  %s0 = inlined_call_operand.vmem [shape: f32[16], index: 0, kind: input, shape index: {}]
  %s1 = inlined_call_operand.vmem [shape: f32[8,16], index: 1, kind: output, shape index: {}]
  // Predicated region
  $region2: #{tile.8} parent=0 // pred_check
    _
  $region3: #{tile.8} parent=0 // pred_check_branch
    %3 = sbr.rel (0) target = $region5
  $region4: #{tile.8} parent=0 // pred_region
    _
  $region5: #{tile.8} parent=0 // pred_fallthru
    _
  %v4 = vld [vmem:[%s0] ss:$0 sm:$0xff]
  %5 = vst [vmem:[%s1] sm:$0xff] %v4

// kernel: tile.9
$region0: #{tile.9}
  %s0 = inlined_call_operand.vmem [shape: f32[8,16], index: 0, kind: input, shape index: {}]
  %s1 = inlined_call_operand.vmem [shape: f32[1,128], index: 1, kind: output, shape index: {}]
  $region1: #{tile.9} parent=0
    #allocation0 [shape = 'u8[4096]{0}', space=vmem, size = 0x1000, scoped, tag = 'scoped mem for output reshape']
    %v2 = vld [vmem:[%s0] sm:$0x1]
    %vm3 = vcmask 130048
    %4 = vst.msk [vmem:[#allocation0] sm:$0x1] %vm3, %v2
    %s5 = scalar_lea.vmem %s0, 7
    %v6 = vld [vmem:[%s5] sm:$0x1]
    %7 = vrot.lane.b32.xlu0 %v6, 112
    %v8 = vpop.permute.xlu0 %7
    %vm9 = vcmask 1048448
    %10 = vst.msk [vmem:[#allocation0] sm:$0x1] %vm9, %v8
    %s11 = scalar_lea.vmem %s0, 6
    %v12 = vld [vmem:[%s11] sm:$0x1]
    %13 = vrot.lane.b32.xlu0 %v12, 96
    %v14 = vpop.permute.xlu0 %13
    %vm15 = vcmask 917248
    %16 = vst.msk [vmem:[#allocation0] sm:$0x1] %vm15, %v14
    %s17 = scalar_lea.vmem %s0, 5
    %v18 = vld [vmem:[%s17] sm:$0x1]
    %19 = vrot.lane.b32.xlu0 %v18, 80
    %v20 = vpop.permute.xlu0 %19
    %vm21 = vcmask 786048
    %22 = vst.msk [vmem:[#allocation0] sm:$0x1] %vm21, %v20
    %s23 = scalar_lea.vmem %s0, 4
    %v24 = vld [vmem:[%s23] sm:$0x1]
    %25 = vrot.lane.b32.xlu0 %v24, 64
    %v26 = vpop.permute.xlu0 %25
    %vm27 = vcmask 654848
    %28 = vst.msk [vmem:[#allocation0] sm:$0x1] %vm27, %v26
    %s29 = scalar_lea.vmem %s0, 3
    %v30 = vld [vmem:[%s29] sm:$0x1]
    %31 = vrot.lane.b32.xlu0 %v30, 48
    %v32 = vpop.permute.xlu0 %31
    %vm33 = vcmask 523648
    %34 = vst.msk [vmem:[#allocation0] sm:$0x1] %vm33, %v32
    %s35 = scalar_lea.vmem %s0, 2
    %v36 = vld [vmem:[%s35] sm:$0x1]
    %37 = vrot.lane.b32.xlu0 %v36, 32
    %v38 = vpop.permute.xlu0 %37
    %vm39 = vcmask 392448
    %40 = vst.msk [vmem:[#allocation0] sm:$0x1] %vm39, %v38
    %s41 = scalar_lea.vmem %s0, 1
    %v42 = vld [vmem:[%s41] sm:$0x1]
    %43 = vrot.lane.b32.xlu0 %v42, 16
    %v44 = vpop.permute.xlu0 %43
    %vm45 = vcmask 261248
    %46 = vst.msk [vmem:[#allocation0] sm:$0x1] %vm45, %v44
    %s48 = ssub.s32 2, 1
    %v49 = vld [vmem:[#allocation0] sm:%s48]
    %s51 = ssub.s32 2, 1
    %52 = vst [vmem:[%s1] sm:%s51] %v49

// kernel: _nll_loss_impl.1
$region0: #{_nll_loss_impl.1}
  #allocation0 [shape = 'u32[]', space=smem, size = 0x4, offset = 0x4, fixed_abs, tag = 'smem constant byte address 0x4 - core index']
  #allocation1 [shape = 'u32[72,128]{1,0:T(1,128)}', space=vmem, size = 0x9000, scoped, tag = 'internal scratch']
  #allocation2 [shape = 'f32[1,128]{1,0:T(1,128)}', space=vmem, size = 0x200, scoped, tag = 'scratch operand']
  #allocation3 [shape = 'f32[1,128]{1,0:T(1,128)}', space=vmem, size = 0x200, scoped, tag = 'scratch operand']
  %s0 = inlined_call_operand.vmem [shape: f32[32,128], index: 0, kind: input, shape index: {}]
  %s1 = inlined_call_operand.vmem [shape: s32[32,8], index: 1, kind: input, shape index: {}]
  %s2 = inlined_call_operand.vmem [shape: f32[1,128], index: 2, kind: input, shape index: {}]
  %s3 = inlined_call_operand.vmem [shape: f32[1,128], index: 3, kind: input, shape index: {}]
  %s4 = inlined_call_operand.vmem [shape: f32[8,128], index: 4, kind: input, shape index: {}]
  %s5 = inlined_call_operand.vmem [shape: f32[8,128], index: 5, kind: output, shape index: {}]
  %s6 = sld [smem:[#allocation0]]
  $region38: #{_nll_loss_impl.1} parent=0
    _
  %s8 = ssub.s32 1, %s6
  %s9 = scalar_select 0, %s8, %s6
  // Predicated region
  $region2: #{_nll_loss_impl.1} parent=0 // pred_check
    _
  $region3: #{_nll_loss_impl.1} parent=0 // pred_check_branch
    %11 = sbr.rel (0) target = $region5
  $region4: #{_nll_loss_impl.1} parent=0 // pred_region
    %s12 = sadd.s32 0, 0
    %p13 = scmp.lt.s32.totalorder %s12, 0
    %s14 = scalar_select %p13, %s12, 0
    %s15 = smul.u32 4, %s14
    %p16 = scmp.lt.s32.totalorder %s15, 3
    %s17 = scalar_select %p16, %s15, 3
    %s18 = smul.addr %s17, 8
    %s19 = scalar_lea.vmem %s0, %s18
    %s20 = sadd.s32 0, 0
    %p21 = scmp.lt.s32.totalorder %s20, 0
    %s22 = scalar_select %p21, %s20, 0
    %s23 = smul.u32 4, %s22
  $region5: #{_nll_loss_impl.1} parent=0 // pred_fallthru
    _
  // Predicated region
  $region6: #{_nll_loss_impl.1} parent=0 // pred_check
    _
  $region7: #{_nll_loss_impl.1} parent=0 // pred_check_branch
    %25 = sbr.rel (0) target = $region9
  $region8: #{_nll_loss_impl.1} parent=0 // pred_region
    %s26 = sadd.s32 0, 0
    %s27 = smul.u32 4, %s26
    %p28 = scmp.lt.s32.totalorder %s27, 3
    %s29 = scalar_select %p28, %s27, 3
    %s30 = smul.addr %s29, 8
    %s31 = scalar_lea.vmem %s1, %s30
    %s32 = sadd.s32 0, 0
    %s33 = smul.u32 4, %s32
  $region9: #{_nll_loss_impl.1} parent=0 // pred_fallthru
    _
  // Predicated region
  $region10: #{_nll_loss_impl.1} parent=0 // pred_check
    _
  $region11: #{_nll_loss_impl.1} parent=0 // pred_check_branch
    %35 = sbr.rel (0) target = $region13
  $region12: #{_nll_loss_impl.1} parent=0 // pred_region
    _
  $region13: #{_nll_loss_impl.1} parent=0 // pred_fallthru
    _
  // Predicated region
  $region14: #{_nll_loss_impl.1} parent=0 // pred_check
    _
  $region15: #{_nll_loss_impl.1} parent=0 // pred_check_branch
    %37 = sbr.rel (0) target = $region17
  $region16: #{_nll_loss_impl.1} parent=0 // pred_region
    _
  $region17: #{_nll_loss_impl.1} parent=0 // pred_fallthru
    _
  // Predicated region
  $region18: #{_nll_loss_impl.1} parent=0 // pred_check
    _
  $region19: #{_nll_loss_impl.1} parent=0 // pred_check_branch
    %39 = sbr.rel (0) target = $region21
  $region20: #{_nll_loss_impl.1} parent=0 // pred_region
    _
  $region21: #{_nll_loss_impl.1} parent=0 // pred_fallthru
    _
  %s40 = sadd.s32 0, 0
  %p41 = scmp.lt.s32.totalorder %s40, 0
  %s42 = scalar_select %p41, %s40, 0
  %s43 = smul.u32 4, %s42
  %p44 = scmp.lt.s32.totalorder %s43, 3
  %s45 = scalar_select %p44, %s43, 3
  %s46 = smul.addr %s45, 8
  %s47 = scalar_lea.vmem %s0, %s46
  %s48 = sadd.s32 0, 0
  %s49 = smul.u32 4, %s48
  %p50 = scmp.lt.s32.totalorder %s49, 3
  %s51 = scalar_select %p50, %s49, 3
  %s52 = smul.addr %s51, 8
  %s53 = scalar_lea.vmem %s1, %s52
  %s54 = sadd.s32 0, 0
  %p55 = scmp.lt.s32.totalorder %s54, 0
  %s56 = scalar_select %p55, %s54, 0
  %s57 = smul.u32 4, %s56
  %p58 = scmp.lt.s32.totalorder %s57, 3
  %s59 = scalar_select %p58, %s57, 3
  %s60 = smul.addr %s59, 8
  %s61 = scalar_lea.vmem %s0, %s60
  %s62 = sadd.s32 0, 0
  %p63 = scmp.lt.s32.totalorder %s62, 0
  %s64 = scalar_select %p63, %s62, 0
  %s65 = smul.u32 4, %s64
  %s66 = sadd.s32 0, 0
  %s67 = smul.u32 4, %s66
  %p68 = scmp.lt.s32.totalorder %s67, 3
  %s69 = scalar_select %p68, %s67, 3
  %s70 = smul.addr %s69, 8
  %s71 = scalar_lea.vmem %s1, %s70
  %s72 = sadd.s32 0, 0
  %s73 = smul.u32 4, %s72
  %p74 = scmp.eq.s32.totalorder 0, 0
  // Predicated region
  $region22: #{_nll_loss_impl.1} parent=0 // pred_check
    %p75 = pneg %p74
  $region23: #{_nll_loss_impl.1} parent=0 // pred_check_branch
    %77 = sbr.rel (%p75) target = $region25
  $region24: #{_nll_loss_impl.1} parent=0 // pred_region
    %78 = vst [vmem:[#allocation2] sm:$0x1] 0.0
    %79 = vst [vmem:[#allocation3] sm:$0x1] 0.0
  $region25: #{_nll_loss_impl.1} parent=0 // pred_fallthru
    _
  %v80 = vld [vmem:[%s61] sm:$0xff]
  %v81 = vld [vmem:[%s61 + $0x8] sm:$0xff]
  %v82 = vld [vmem:[%s61 + $0x10] sm:$0xff]
  %v83 = vld [vmem:[%s61 + $0x18] sm:$0xff]
  %v84 = vld [vmem:[%s2] sm:$0x1]
  %v85 = vld [vmem:[%s3] sm:$0x1]
  %v86 = vld [vmem:[%s71] sm:$0xff]
  %v87 = vld [vmem:[%s71 + $0x8] sm:$0xff]
  %v88 = vld [vmem:[%s71 + $0x10] sm:$0xff]
  %v89 = vld [vmem:[%s71 + $0x18] sm:$0xff]
  %v90 = vcvt.s32.f32 %v86
  %v91 = vcvt.s32.f32 %v87
  %v92 = vcvt.s32.f32 %v88
  %v93 = vcvt.s32.f32 %v89
  %v94 = vld [vmem:[%s4] sm:$0xff]
  %vm95 = vcmask 64512
  %v97 = vsel %vm95, %v90, 0
  %v100 = vsel %vm95, %v91, 0
  %v103 = vsel %vm95, %v92, 0
  %v106 = vsel %vm95, %v93, 0
  %108 = vmatpush.msra.mxu0 0.0
  %109 = vmatpush.msra.mxu0 0.0
  %110 = vmatpush.msra.mxu0 0.0
  %111 = vmatpush.msra.mxu0 0.0
  %112 = vmatpush.msra.mxu0 0.0
  %113 = vmatpush.msra.mxu0 0.0
  %114 = vmatpush.msra.mxu0 0.0
  %115 = vmatpush.msra.mxu0 0.0
  %116 = vmatpush.msra.mxu0 0.0
  %117 = vmatpush.msra.mxu0 0.0
  %118 = vmatpush.msra.mxu0 0.0
  %119 = vmatpush.msra.mxu0 0.0
  %120 = vmatpush.msra.mxu0 0.0
  %121 = vmatpush.msra.mxu0 0.0
  %122 = vmatpush.msra.mxu0 0.0
  %123 = vmatpush.msra.mxu0 %v94
  %124 = vmatmul.f32.gmra.mxu0 %v97
  %v125 = vpop.f32.mrf.mxu0
  %v126 = vadd.f32 0.0, %v125
  %127 = vmatmul.f32.gmra.mxu0 %v100
  %v128 = vpop.f32.mrf.mxu0
  %v129 = vadd.f32 0.0, %v128
  %130 = vmatmul.f32.gmra.mxu0 %v103
  %v131 = vpop.f32.mrf.mxu0
  %v132 = vadd.f32 0.0, %v131
  %133 = vmatmul.f32.gmra.mxu0 %v106
  %v134 = vpop.f32.mrf.mxu0
  %v135 = vadd.f32 0.0, %v134
  %136 = vdwg.mxu0
  %v138 = vperm.slane %v85, 0
  %vm140 = vcmp.eq.f32.partialorder %v138, %v126
  %vm141 = vcmp.eq.f32.partialorder %v138, %v129
  %vm142 = vcmp.eq.f32.partialorder %v138, %v132
  %vm143 = vcmp.eq.f32.partialorder %v138, %v135
  %v145 = vperm.slane %v84, 0
  %v147 = vsel %vm140, %v145, 0.0
  %v148 = vsel %vm141, %v145, 0.0
  %v149 = vsel %vm142, %v145, 0.0
  %v150 = vsel %vm143, %v145, 0.0
  %v151 = vmul.f32 %v80, %v145
  %v152 = vmul.f32 %v81, %v145
  %v153 = vmul.f32 %v82, %v145
  %v154 = vmul.f32 %v83, %v145
  %v155 = vsel %vm140, %v151, 0.0
  %v156 = vsel %vm141, %v152, 0.0
  %v157 = vsel %vm142, %v153, 0.0
  %v158 = vsel %vm143, %v154, 0.0
  %v159 = vld [vmem:[#allocation2] sm:$0x1]
  %v160 = vadd.f32 %v155, %v156
  %v161 = vadd.f32 %v160, %v157
  %v162 = vadd.f32 %v161, %v158
  %v163 = vrot.slane %v162, 4
  %v164 = vadd.f32 %v162, %v163
  %v165 = vrot.slane %v164, 2
  %v166 = vadd.f32 %v164, %v165
  %v167 = vrot.slane %v166, 1
  %v168 = vadd.f32 %v166, %v167
  %v169 = vadd.f32 %v159, %v168
  %170 = vst [vmem:[#allocation2] sm:$0x1] %v169
  %v171 = vld [vmem:[#allocation3] sm:$0x1]
  %v172 = vadd.f32 %v147, %v148
  %v173 = vadd.f32 %v172, %v149
  %v174 = vadd.f32 %v173, %v150
  %v175 = vrot.slane %v174, 4
  %v176 = vadd.f32 %v174, %v175
  %v177 = vrot.slane %v176, 2
  %v178 = vadd.f32 %v176, %v177
  %v179 = vrot.slane %v178, 1
  %v180 = vadd.f32 %v178, %v179
  %v181 = vadd.f32 %v171, %v180
  %182 = vst [vmem:[#allocation3] sm:$0x1] %v181
  // Predicated region
  $region26: #{_nll_loss_impl.1} parent=0 // pred_check
    %p183 = pneg %p74
  $region27: #{_nll_loss_impl.1} parent=0 // pred_check_branch
    %185 = sbr.rel (%p183) target = $region29
  $region28: #{_nll_loss_impl.1} parent=0 // pred_region
    %v186 = vld [vmem:[#allocation2] sm:$0x1]
    %vm187 = vcmask 1040384
    %v188 = vsel %vm187, %v186, 0.0
    %189 = vadd.xlane.f32.xlu0 %v188
    %v190 = vpop.xlane.xlu0 %189
    %v191 = vld [vmem:[#allocation3] sm:$0x1]
    %v192 = vsel %vm187, %v191, 0.0
    %193 = vadd.xlane.f32.xlu0 %v192
    %v194 = vpop.xlane.xlu0 %193
    %v195 = vlaneseq
    %v196 = vand.u32 %v195, 127
    %vm197 = vcmp.eq.s32.totalorder %v196, 0
    %vm198 = vcmp.eq.s32.totalorder %v196, 1
    %v199 = vperm.slane %v194, 0
    %v200 = vsel %vm198, %v199, 0.0
    %v201 = vperm.slane %v190, 0
    %v202 = vsel %vm197, %v201, %v200
    %203 = vst [vmem:[%s5] sm:$0xff] %v202
  $region29: #{_nll_loss_impl.1} parent=0 // pred_fallthru
    _
  // Predicated region
  $region30: #{_nll_loss_impl.1} parent=0 // pred_check
    _
  $region31: #{_nll_loss_impl.1} parent=0 // pred_check_branch
    %205 = sbr.rel (0) target = $region33
  $region32: #{_nll_loss_impl.1} parent=0 // pred_region
    _
  $region33: #{_nll_loss_impl.1} parent=0 // pred_fallthru
    _
  // Predicated region
  $region34: #{_nll_loss_impl.1} parent=0 // pred_check
    _
  $region35: #{_nll_loss_impl.1} parent=0 // pred_check_branch
    %207 = sbr.rel (0) target = $region37
  $region36: #{_nll_loss_impl.1} parent=0 // pred_region
    _
  $region37: #{_nll_loss_impl.1} parent=0 // pred_fallthru
    _

</llo_original>
